<compile_context>
chip_gen: v6e
topology: v6e:2x2x1
jax: 0.10.0
libtpu: 0.0.40
codegen_flags: <defaults>
</compile_context>

<pallas_src>
import math

import jax
import jax.numpy as jnp
from jax.experimental import pallas as pl
from jax.experimental.pallas import tpu as pltpu


def _pe_add_kernel(x_ref, pe_ref, o_ref):
    # x_ref: (tS, B, D) VMEM tile, pe_ref: (tS, 1, D) VMEM tile.
    # Elementwise add with a sublane broadcast over the batch axis.
    o_ref[...] = x_ref[...] + pe_ref[...]


def make_positional_encoding_table(d_model, max_len=5000, dtype=jnp.float32):
    """Deterministic sinusoidal table, matching the PyTorch __init__.

    Stored as (max_len, 1, d_model) in the model dtype so the forward pass never
    slices / reshapes / casts it (zero wrapper-side ops per call).
    """
    position = jnp.arange(0, max_len, dtype=jnp.float32)[:, None]          # (max_len, 1)
    div_term = jnp.exp(
        jnp.arange(0, d_model, 2, dtype=jnp.float32) * (-math.log(10000.0) / d_model)
    )                                                                       # (d_model/2,)
    angles = position * div_term                                            # (max_len, d_model/2)
    pe = jnp.zeros((max_len, d_model), dtype=jnp.float32)
    pe = pe.at[:, 0::2].set(jnp.sin(angles))
    pe = pe.at[:, 1::2].set(jnp.cos(angles))
    return pe.astype(dtype).reshape(max_len, 1, d_model)                    # (max_len, 1, D)


_MIN_TILE_PAYLOAD_BYTES = 1 * 1024 * 1024   # don't over-fragment the grid
_TARGET_GRID_STEPS = 8                      # v7x megacore sharding + DMA ramp-up


def _round_up(x, m):
    return ((x + m - 1) // m) * m


def _sublane_multiple(dtype):
    # Second-minor dim pads to 8 (f32), 16 (bf16), 32 (int8/fp8) sublanes in VMEM.
    return max(1, 32 // jnp.dtype(dtype).itemsize)


def _padded_tile_bytes(rows, second_minor, minor, dtype):
    """True VMEM footprint of a (rows, second_minor, minor) tile after tiling pads."""
    itemsize = jnp.dtype(dtype).itemsize
    return (
        rows
        * _round_up(second_minor, _sublane_multiple(dtype))
        * _round_up(minor, 128)
        * itemsize
    )


def _vmem_budgets():
    """(pipelined-buffer budget, scoped-VMEM cap) chosen per TPU generation."""
    try:
        cap = int(pltpu.get_tpu_info().vmem_capacity_bytes)
    except Exception:
        cap = 64 * 1024 * 1024                      # assume smallest (v7x-class) VMEM
    if cap <= 64 * 1024 * 1024:                     # v7x: 64 MiB/TC -> leave headroom
        return 20 * 1024 * 1024, 40 * 1024 * 1024
    return 32 * 1024 * 1024, 48 * 1024 * 1024       # v5e / v6e: 128 MiB physical


def _choose_tile_rows(S, B, D, dtype, budget_bytes):
    """Largest sequence tile whose *padded* double-buffered footprint fits the budget,
    capped so the grid has enough steps for megacore sharding, preferring an exact
    divisor of S (no ragged trailing tile)."""
    row_xo = _padded_tile_bytes(1, B, D, dtype)     # one seq row of x (and of out)
    row_pe = _padded_tile_bytes(1, 1, D, dtype)     # one seq row of pe (padded sublanes)
    per_row = 2 * (2 * row_xo + row_pe)             # double-buffered x, out, pe
    t_s = max(1, min(S, budget_bytes // max(1, per_row)))

    # ~8 grid steps for v7x's 2 TensorCores / pipeline ramp-up, but never shrink a
    # tile below ~1 MiB of payload (per-step overhead ~0.35 us must stay amortized).
    rows_min = max(1, _MIN_TILE_PAYLOAD_BYTES // max(1, row_xo))
    t_s = min(t_s, max(pl.cdiv(S, _TARGET_GRID_STEPS), rows_min))
    t_s = max(1, min(t_s, S))

    # Prefer an exact divisor of S (removes masked loads/stores on a ragged last
    # tile), as long as it does not shrink the tile by more than 2x.
    for cand in range(t_s, 0, -1):
        if S % cand == 0:
            if 2 * cand >= t_s:
                t_s = cand
            break
    return int(t_s)


def positional_encoding_forward(x, pe_table, *, tile_rows=None, donate_x=False):
    """x: (S, B, D); pe_table: (max_len, 1, D). Returns x + pe[:S] broadcast over B.

    Eval-mode forward of the PyTorch module (dropout is the identity).
    tile_rows: optional override of the sequence-tile size.
    donate_x:  alias the output onto x's buffer (only if the caller is done with x).
    """
    S, B, D = x.shape
    max_len = pe_table.shape[0]
    assert pe_table.shape == (max_len, 1, D), "pe_table must be (max_len, 1, d_model)"
    assert S <= max_len, "sequence length exceeds positional-encoding max_len"
    if pe_table.dtype != x.dtype:
        # Prefer precomputing the table in the model dtype; this is a fallback.
        pe_table = pe_table.astype(x.dtype)

    budget, limit_cap = _vmem_budgets()
    t_s = tile_rows if tile_rows is not None else _choose_tile_rows(S, B, D, x.dtype, budget)
    t_s = max(1, min(int(t_s), S))
    grid = (pl.cdiv(S, t_s),)

    # Scoped-VMEM limit derived from the actual padded, double-buffered footprint.
    footprint = 2 * (
        2 * _padded_tile_bytes(t_s, B, D, x.dtype) + _padded_tile_bytes(t_s, 1, D, x.dtype)
    )
    vmem_limit = min(limit_cap, max(16 * 1024 * 1024, footprint + 4 * 1024 * 1024))
    vmem_limit = max(vmem_limit, footprint + 1 * 1024 * 1024)

    itemsize = jnp.dtype(x.dtype).itemsize
    cost = pl.CostEstimate(
        flops=S * B * D,
        transcendentals=0,
        bytes_accessed=(2 * S * B * D + S * D) * itemsize,
    )

    out = pl.pallas_call(
        _pe_add_kernel,
        out_shape=jax.ShapeDtypeStruct((S, B, D), x.dtype),
        grid=grid,
        in_specs=[
            pl.BlockSpec((t_s, B, D), lambda i: (i, 0, 0)),
            pl.BlockSpec((t_s, 1, D), lambda i: (i, 0, 0)),
        ],
        out_specs=pl.BlockSpec((t_s, B, D), lambda i: (i, 0, 0)),
        compiler_params=pltpu.CompilerParams(
            dimension_semantics=("parallel",),
            vmem_limit_bytes=int(vmem_limit),
        ),
        cost_estimate=cost,
        input_output_aliases=({0: 0} if donate_x else {}),
    )(x, pe_table)
    return out


if __name__ == "__main__":
    key = jax.random.PRNGKey(0)

    # --- Small shapes consistent with the module's forward: (seq, batch, d_model) ---
    S, B, D = 8, 2, 32
    max_len = 64  # synthetic (module default is 5000; only the first S rows are read)
    x = jax.random.normal(key, (S, B, D), dtype=jnp.float32)
    pe_table = make_positional_encoding_table(D, max_len=max_len, dtype=x.dtype)

    out = positional_encoding_forward(x, pe_table)        # auto-tiled path
    out = jax.block_until_ready(out)

    ref = x + pe_table[:S]                                 # (S,1,D) broadcasts over B
    assert out.shape == (S, B, D)
    assert jnp.allclose(out, ref, atol=1e-6), "mismatch vs reference (small shape)"

    # --- Second check: lane-dense D and a multi-step grid (exercises tiling path) ---
    S2, B2, D2 = 256, 8, 128
    key2 = jax.random.PRNGKey(0)
    x2 = jax.random.normal(key2, (S2, B2, D2), dtype=jnp.float32)
    pe_table2 = make_positional_encoding_table(D2, max_len=512, dtype=x2.dtype)

    out2 = positional_encoding_forward(x2, pe_table2, tile_rows=64)   # grid of 4 steps
    out2 = jax.block_until_ready(out2)

    ref2 = x2 + pe_table2[:S2]
    assert out2.shape == (S2, B2, D2)
    assert jnp.allclose(out2, ref2, atol=1e-6), "mismatch vs reference (tiled shape)"

    print("KERNEL_OK")
</pallas_src>

<mosaic_0001>
module attributes {stable_mosaic.version = 11 : i64} {
  func.func @_pe_add_kernel(%arg0: i32, %arg1: memref<8x2x32xf32, #tpu.memory_space<vmem>>, %arg2: memref<8x1x32xf32, #tpu.memory_space<vmem>>, %arg3: memref<8x2x32xf32, #tpu.memory_space<vmem>>) attributes {dimension_semantics = [#tpu.dimension_semantics<parallel>], iteration_bounds = array<i64: 1>, scalar_prefetch = 0 : i64, scratch_operands = 0 : i64, tpu.core_type = #tpu.core_type<tc>, window_params = [{transform_indices = @transform_0, window_bounds = array<i64: 8, 2, 32>}, {transform_indices = @transform_1, window_bounds = array<i64: 8, 1, 32>}, {transform_indices = @transform_2, window_bounds = array<i64: 8, 2, 32>}]} {
    %c0 = arith.constant 0 : index
    %c0_0 = arith.constant 0 : index
    %c0_1 = arith.constant 0 : index
    %0 = vector.load %arg1[%c0, %c0_0, %c0_1] : memref<8x2x32xf32, #tpu.memory_space<vmem>>, vector<8x2x32xf32>
    %c0_2 = arith.constant 0 : index
    %c0_3 = arith.constant 0 : index
    %c0_4 = arith.constant 0 : index
    %1 = vector.load %arg2[%c0_2, %c0_3, %c0_4] : memref<8x1x32xf32, #tpu.memory_space<vmem>>, vector<8x1x32xf32>
    %2 = vector.broadcast %1 : vector<8x1x32xf32> to vector<8x2x32xf32>
    %3 = arith.addf %0, %2 : vector<8x2x32xf32>
    %c0_5 = arith.constant 0 : index
    %c0_6 = arith.constant 0 : index
    %c0_7 = arith.constant 0 : index
    %4 = vector.load %arg3[%c0_5, %c0_6, %c0_7] : memref<8x2x32xf32, #tpu.memory_space<vmem>>, vector<8x2x32xf32>
    tpu.vector_store %arg3[%c0_5, %c0_6, %c0_7], %3 {strides = array<i32>} : memref<8x2x32xf32, #tpu.memory_space<vmem>>, vector<8x2x32xf32>,
    return
  }
  func.func @transform_0(%arg0: i32) -> (i32, i32, i32) {
    %c0_i32 = arith.constant 0 : i32
    %c0_i32_0 = arith.constant 0 : i32
    %c0_i32_1 = arith.constant 0 : i32
    return %arg0, %c0_i32, %c0_i32_0 : i32, i32, i32
  }
  func.func @transform_1(%arg0: i32) -> (i32, i32, i32) {
    %c0_i32 = arith.constant 0 : i32
    %c0_i32_0 = arith.constant 0 : i32
    %c0_i32_1 = arith.constant 0 : i32
    return %arg0, %c0_i32, %c0_i32_0 : i32, i32, i32
  }
  func.func @transform_2(%arg0: i32) -> (i32, i32, i32) {
    %c0_i32 = arith.constant 0 : i32
    %c0_i32_0 = arith.constant 0 : i32
    %c0_i32_1 = arith.constant 0 : i32
    return %arg0, %c0_i32, %c0_i32_0 : i32, i32, i32
  }
}

</mosaic_0001>

<llo_original>
// kernel: tpu_custom_call.1
$region0: #{tpu_custom_call.1}
  #allocation0 [shape = 'u32[]', space=smem, size = 0x4, offset = 0x4, fixed_abs, tag = 'smem constant byte address 0x4 - core index']
  #allocation1 [shape = 'u32[144,128]{1,0:T(1,128)}', space=vmem, size = 0x12000, scoped, tag = 'internal scratch']
  %s0 = inlined_call_operand.vmem [shape: f32[8,2,32], index: 0, kind: input, shape index: {}]
  %s1 = inlined_call_operand.vmem [shape: f32[64,1,32], index: 1, kind: input, shape index: {}]
  %s2 = inlined_call_operand.hbm [shape: f32[8,2,32], index: 2, kind: output, shape index: {}]
  %s3 = sld [smem:[#allocation0]]
  $region18: #{tpu_custom_call.1} parent=0
    _
  %s5 = ssub.s32 1, %s3
  %s6 = scalar_select 0, %s5, %s3
  $region1: #{tpu_custom_call.1} parent=0
    #allocation2 [shape = 'u8[8192]{0}', space=vmem, size = 0x2000, scoped, tag = 'output window, operand 0, single buffered']
    #allocation3 [shape = 's32[1]{0}', space=sflag, size = 0x4, scoped, tag = 'scoped memory for tpu_custom_call.1']
    %7 = vsyncpa [#allocation3], 0
    // Predicated region
    $region2: #{tpu_custom_call.1} parent=1 // pred_check
      _
    $region3: #{tpu_custom_call.1} parent=1 // pred_check_branch
      %9 = sbr.rel (0) target = $region5
    $region4: #{tpu_custom_call.1} parent=1 // pred_region
      _
    $region5: #{tpu_custom_call.1} parent=1 // pred_fallthru
      _
    // Predicated region
    $region6: #{tpu_custom_call.1} parent=1 // pred_check
      _
    $region7: #{tpu_custom_call.1} parent=1 // pred_check_branch
      %11 = sbr.rel (0) target = $region9
    $region8: #{tpu_custom_call.1} parent=1 // pred_region
      _
    $region9: #{tpu_custom_call.1} parent=1 // pred_fallthru
      _
    %v12 = vld [vmem:[%s0] sm:$0x3]
    %v13 = vld [vmem:[%s0 + $0x2] sm:$0x3]
    %v14 = vld [vmem:[%s0 + $0x4] sm:$0x3]
    %v15 = vld [vmem:[%s0 + $0x6] sm:$0x3]
    %v16 = vld [vmem:[%s0 + $0x8] sm:$0x3]
    %v17 = vld [vmem:[%s0 + $0xa] sm:$0x3]
    %v18 = vld [vmem:[%s0 + $0xc] sm:$0x3]
    %v19 = vld [vmem:[%s0 + $0xe] sm:$0x3]
    %v20 = vld [vmem:[%s1] sm:$0x1]
    %v21 = vld [vmem:[%s1 + $0x1] sm:$0x1]
    %v22 = vld [vmem:[%s1 + $0x2] sm:$0x1]
    %v23 = vld [vmem:[%s1 + $0x3] sm:$0x1]
    %v24 = vld [vmem:[%s1 + $0x4] sm:$0x1]
    %v25 = vld [vmem:[%s1 + $0x5] sm:$0x1]
    %v26 = vld [vmem:[%s1 + $0x6] sm:$0x1]
    %v27 = vld [vmem:[%s1 + $0x7] sm:$0x1]
    %v36 = vlaneseq
    %v37 = vshrl.u32 %v36, 7
    %v38 = vsub.s32 0, %v37
    %v39 = vrot.slane %v20, %v38
    %v40 = vlaneseq
    %v41 = vshrl.u32 %v40, 7
    %v42 = vsub.s32 0, %v41
    %v43 = vrot.slane %v21, %v42
    %v44 = vlaneseq
    %v45 = vshrl.u32 %v44, 7
    %v46 = vsub.s32 0, %v45
    %v47 = vrot.slane %v22, %v46
    %v48 = vlaneseq
    %v49 = vshrl.u32 %v48, 7
    %v50 = vsub.s32 0, %v49
    %v51 = vrot.slane %v23, %v50
    %v52 = vlaneseq
    %v53 = vshrl.u32 %v52, 7
    %v54 = vsub.s32 0, %v53
    %v55 = vrot.slane %v24, %v54
    %v56 = vlaneseq
    %v57 = vshrl.u32 %v56, 7
    %v58 = vsub.s32 0, %v57
    %v59 = vrot.slane %v25, %v58
    %v60 = vlaneseq
    %v61 = vshrl.u32 %v60, 7
    %v62 = vsub.s32 0, %v61
    %v63 = vrot.slane %v26, %v62
    %v64 = vlaneseq
    %v65 = vshrl.u32 %v64, 7
    %v66 = vsub.s32 0, %v65
    %v67 = vrot.slane %v27, %v66
    %v76 = vadd.f32 %v12, %v39
    %v77 = vadd.f32 %v13, %v43
    %v78 = vadd.f32 %v14, %v47
    %v79 = vadd.f32 %v15, %v51
    %v80 = vadd.f32 %v16, %v55
    %v81 = vadd.f32 %v17, %v59
    %v82 = vadd.f32 %v18, %v63
    %v83 = vadd.f32 %v19, %v67
    %vm84 = vcmask 254976
    %85 = vst.msk [vmem:[#allocation2] sm:$0x3] %vm84, %v76
    %86 = vst.msk [vmem:[#allocation2 + $0x2] sm:$0x3] %vm84, %v77
    %87 = vst.msk [vmem:[#allocation2 + $0x4] sm:$0x3] %vm84, %v78
    %88 = vst.msk [vmem:[#allocation2 + $0x6] sm:$0x3] %vm84, %v79
    %89 = vst.msk [vmem:[#allocation2 + $0x8] sm:$0x3] %vm84, %v80
    %90 = vst.msk [vmem:[#allocation2 + $0xa] sm:$0x3] %vm84, %v81
    %91 = vst.msk [vmem:[#allocation2 + $0xc] sm:$0x3] %vm84, %v82
    %92 = vst.msk [vmem:[#allocation2 + $0xe] sm:$0x3] %vm84, %v83
    // Predicated region
    $region10: #{tpu_custom_call.1} parent=1 // pred_check
      _
    $region11: #{tpu_custom_call.1} parent=1 // pred_check_branch
      %94 = sbr.rel (0) target = $region13
    $region12: #{tpu_custom_call.1} parent=1 // pred_region
      %s96 = ssub.s32 256, 256
      %97 = vsyncadd [#allocation3], %s96
      %s98 = sshll.u32 [#allocation2], 4
      %s99 = int_to_ptr.vmem [resolvable:$true] %s98
      %104 = dma.vmem_to_hbm [thread:$0]  %s99, 256, %s2, [#allocation3], 32, 32, 2
    $region13: #{tpu_custom_call.1} parent=1 // pred_fallthru
      _
    // Predicated region
    $region14: #{tpu_custom_call.1} parent=1 // pred_check
      _
    $region15: #{tpu_custom_call.1} parent=1 // pred_check_branch
      %106 = sbr.rel (0) target = $region17
    $region16: #{tpu_custom_call.1} parent=1 // pred_region
      %107 = dma.done [#allocation3], 256
    $region17: #{tpu_custom_call.1} parent=1 // pred_fallthru
      _
    %108 = vsyncpa [#allocation3], 1

</llo_original>
